<compile_context>
chip_gen: v5e
topology: v5e:2x2
jax: 0.10.0
libtpu: 0.0.40
codegen_flags: <defaults>
</compile_context>

<pallas_src>
import functools

import jax
import jax.numpy as jnp
from jax.experimental import pallas as pl
from jax.experimental.pallas import tpu as pltpu


def _round_up(n, m):
    return ((n + m - 1) // m) * m


def _policy_kernel(x_ref, w1_ref, b1_ref, w2_ref, b2_ref, out_ref):
    # One batch tile per grid step; both matmuls (MXU, bf16 in / f32 acc),
    # bias adds, ReLU and a numerically stable softmax are fused.  Invalid
    # output columns carry a -inf bias so they contribute exp(-inf)=0 and the
    # store stays lane-dense.
    x = x_ref[...]                                                    # bf16 (TM, D_in)
    h = jnp.dot(x, w1_ref[...], preferred_element_type=jnp.float32)   # f32 (TM, 256)
    h = jnp.maximum(h + b1_ref[...], 0.0)                             # bias + ReLU

    logits = jnp.dot(h.astype(jnp.bfloat16), w2_ref[...],
                     preferred_element_type=jnp.float32)              # f32 (TM, N_pad)
    logits = logits + b2_ref[...]                                     # -inf on masked cols

    m = jnp.max(logits, axis=-1, keepdims=True)
    e = jnp.exp(logits - m)                                           # masked cols -> 0
    s = jnp.sum(e, axis=-1, keepdims=True)
    out_ref[...] = (e / s).astype(out_ref.dtype)                      # exact normalization


@functools.partial(jax.jit, static_argnames=("avoid_last", "block_b"))
def policy_net_single_layer(x, w1, b1, w2, b2, *, avoid_last=False, block_b=2048):
    """Fused forward pass.

    x : (B, num_inputs) float32
    w1: (num_inputs, 256), b1: (1, 256)
    w2: (256, num_outputs), b2: (1, num_outputs)
    returns (B, num_outputs) or (B, num_outputs - 1) if avoid_last.
    """
    x = jnp.asarray(x, jnp.float32)
    B, d_in = x.shape
    hidden, d_out = w2.shape
    out_cols = d_out - 1 if avoid_last else d_out
    assert out_cols >= 1, "avoid_last=True requires num_outputs >= 2"

    # --- lane-dense output: pad second-layer weights/bias to a 128 multiple.
    n_pad = _round_up(d_out, 128)
    w2p = jnp.zeros((hidden, n_pad), jnp.bfloat16).at[:, :d_out].set(
        w2.astype(jnp.bfloat16))
    # -inf bias on every column that must not participate in the softmax
    # (padding columns, plus the last real column when avoid_last=True).
    b2p = jnp.full((1, n_pad), -jnp.inf, jnp.float32)
    b2p = b2p.at[:, :out_cols].set(b2[:, :out_cols].astype(jnp.float32))

    # --- batch tiling: bf16-sublane-aligned tile, padded batch, 1-D grid.
    ALIGN = 16  # bf16 packs 16 rows per vreg sublane group
    tm = min(block_b, _round_up(B, ALIGN))
    tm = _round_up(tm, ALIGN)
    # v7x has 2 TensorCores: make sure the "parallel" batch grid has >= 2
    # steps when the batch is big enough to split (no-op on tiny batches).
    if _round_up(B, tm) == tm and B > ALIGN:
        tm = _round_up((tm + 1) // 2, ALIGN)
    b_pad = _round_up(B, tm)

    xb = x.astype(jnp.bfloat16)
    if b_pad != B:
        xb = jnp.pad(xb, ((0, b_pad - B), (0, 0)))
    grid = (b_pad // tm,)

    out = pl.pallas_call(
        _policy_kernel,
        out_shape=jax.ShapeDtypeStruct((b_pad, n_pad), jnp.float32),
        grid=grid,
        in_specs=[
            pl.BlockSpec((tm, d_in), lambda i: (i, 0)),       # x tile per step
            pl.BlockSpec((d_in, hidden), lambda i: (0, 0)),   # weights resident
            pl.BlockSpec((1, hidden), lambda i: (0, 0)),
            pl.BlockSpec((hidden, n_pad), lambda i: (0, 0)),
            pl.BlockSpec((1, n_pad), lambda i: (0, 0)),
        ],
        out_specs=pl.BlockSpec((tm, n_pad), lambda i: (i, 0)),
        compiler_params=pltpu.CompilerParams(
            dimension_semantics=("parallel",)),
    )(xb, w1.astype(jnp.bfloat16), b1.astype(jnp.float32), w2p, b2p)

    # Free layout plumbing in the wrapper: drop batch padding and pad columns.
    return out[:B, :out_cols]


def _init_params(key, num_inputs, num_outputs, hidden=256):
    # Deterministic init mimicking PyTorch nn.Linear default:
    # U(-1/sqrt(fan_in), 1/sqrt(fan_in)) for both weight and bias.
    k1, k2, k3, k4 = jax.random.split(key, 4)
    bound1 = 1.0 / jnp.sqrt(num_inputs)
    bound2 = 1.0 / jnp.sqrt(hidden)
    w1 = jax.random.uniform(k1, (num_inputs, hidden), jnp.float32, -bound1, bound1)
    b1 = jax.random.uniform(k2, (1, hidden), jnp.float32, -bound1, bound1)
    w2 = jax.random.uniform(k3, (hidden, num_outputs), jnp.float32, -bound2, bound2)
    b2 = jax.random.uniform(k4, (1, num_outputs), jnp.float32, -bound2, bound2)
    return w1, b1, w2, b2


def _reference(x, w1, b1, w2, b2, avoid_last):
    h = jnp.maximum(x @ w1 + b1, 0.0)
    logits = h @ w2 + b2
    if avoid_last:
        logits = logits[:, :-1]
    return jax.nn.softmax(logits, axis=-1)


if __name__ == "__main__":
    key = jax.random.PRNGKey(0)
    kx, kp, kx2 = jax.random.split(key, 3)

    num_inputs, num_outputs = 32, 10
    w1, b1, w2, b2 = _init_params(kp, num_inputs, num_outputs)

    # ---- small-batch test (both flags) ----
    B = 4
    x = jax.random.normal(kx, (B, num_inputs), jnp.float32)

    out = jax.block_until_ready(
        policy_net_single_layer(x, w1, b1, w2, b2, avoid_last=False))
    out_avoid = jax.block_until_ready(
        policy_net_single_layer(x, w1, b1, w2, b2, avoid_last=True))

    ref = _reference(x, w1, b1, w2, b2, False)
    ref_avoid = _reference(x, w1, b1, w2, b2, True)
    # tolerance covers bf16 MXU inputs (accumulation + softmax are f32)
    assert out.shape == (B, num_outputs)
    assert out_avoid.shape == (B, num_outputs - 1)
    assert jnp.allclose(out, ref, atol=1e-2, rtol=1e-2)
    assert jnp.allclose(out_avoid, ref_avoid, atol=1e-2, rtol=1e-2)
    # exact normalization -> rows sum to 1 to f32 precision
    assert jnp.allclose(jnp.sum(out, axis=-1), 1.0, atol=1e-3)
    assert jnp.allclose(jnp.sum(out_avoid, axis=-1), 1.0, atol=1e-3)

    # ---- larger-batch test exercising the tiled/parallel grid path ----
    B2 = 1024
    x2 = jax.random.normal(kx2, (B2, num_inputs), jnp.float32)
    # default block_b=2048 -> 2 grid steps of 512 rows (both v7x TCs busy)
    out2 = jax.block_until_ready(
        policy_net_single_layer(x2, w1, b1, w2, b2, avoid_last=True))
    ref2 = _reference(x2, w1, b1, w2, b2, True)
    assert out2.shape == (B2, num_outputs - 1)
    assert jnp.allclose(out2, ref2, atol=1e-2, rtol=1e-2)
    assert jnp.allclose(jnp.sum(out2, axis=-1), 1.0, atol=1e-3)

    # smaller tiles -> 4 grid steps, same numerics
    out3 = jax.block_until_ready(
        policy_net_single_layer(x2, w1, b1, w2, b2, avoid_last=False, block_b=256))
    ref3 = _reference(x2, w1, b1, w2, b2, False)
    assert out3.shape == (B2, num_outputs)
    assert jnp.allclose(out3, ref3, atol=1e-2, rtol=1e-2)

    print("KERNEL_OK")
</pallas_src>

<mosaic_0001>
module attributes {stable_mosaic.version = 11 : i64} {
  func.func @_policy_kernel(%arg0: i32, %arg1: memref<16x32xbf16, #tpu.memory_space<vmem>>, %arg2: memref<32x256xbf16, #tpu.memory_space<vmem>>, %arg3: memref<1x256xf32, #tpu.memory_space<vmem>>, %arg4: memref<256x128xbf16, #tpu.memory_space<vmem>>, %arg5: memref<1x128xf32, #tpu.memory_space<vmem>>, %arg6: memref<16x128xf32, #tpu.memory_space<vmem>>) attributes {dimension_semantics = [#tpu.dimension_semantics<parallel>], iteration_bounds = array<i64: 1>, scalar_prefetch = 0 : i64, scratch_operands = 0 : i64, tpu.core_type = #tpu.core_type<tc>, window_params = [{transform_indices = @transform_0, window_bounds = array<i64: 16, 32>}, {pipeline_mode = #tpu.pipeline_mode<synchronous>, transform_indices = @transform_1, window_bounds = array<i64: 32, 256>}, {pipeline_mode = #tpu.pipeline_mode<synchronous>, transform_indices = @transform_2, window_bounds = array<i64: 1, 256>}, {pipeline_mode = #tpu.pipeline_mode<synchronous>, transform_indices = @transform_3, window_bounds = array<i64: 256, 128>}, {pipeline_mode = #tpu.pipeline_mode<synchronous>, transform_indices = @transform_4, window_bounds = array<i64: 1, 128>}, {transform_indices = @transform_5, window_bounds = array<i64: 16, 128>}]} {
    %c0 = arith.constant 0 : index
    %c0_0 = arith.constant 0 : index
    %0 = vector.load %arg1[%c0, %c0_0] : memref<16x32xbf16, #tpu.memory_space<vmem>>, vector<16x32xbf16>
    %c0_1 = arith.constant 0 : index
    %c0_2 = arith.constant 0 : index
    %1 = vector.load %arg2[%c0_1, %c0_2] : memref<32x256xbf16, #tpu.memory_space<vmem>>, vector<32x256xbf16>
    %cst = arith.constant dense<0.000000e+00> : vector<16x256xf32>
    %2 = tpu.matmul %0, %1, %cst {dimension_numbers = #tpu.dot_dimension_numbers<[1], [0], [0], [1], [0, 0, 1, 1], [], []>} : vector<16x32xbf16>, vector<32x256xbf16>, vector<16x256xf32> -> vector<16x256xf32>
    %c0_3 = arith.constant 0 : index
    %c0_4 = arith.constant 0 : index
    %3 = vector.load %arg3[%c0_3, %c0_4] : memref<1x256xf32, #tpu.memory_space<vmem>>, vector<1x256xf32>
    %4 = vector.broadcast %3 : vector<1x256xf32> to vector<16x256xf32>
    %5 = arith.addf %2, %4 : vector<16x256xf32>
    %cst_5 = arith.constant 0.000000e+00 : f32
    %6 = vector.broadcast %cst_5 : f32 to vector<16x256xf32>
    %7 = arith.maximumf %5, %6 : vector<16x256xf32>
    %8 = arith.truncf %7 : vector<16x256xf32> to vector<16x256xbf16>
    %c0_6 = arith.constant 0 : index
    %c0_7 = arith.constant 0 : index
    %9 = vector.load %arg4[%c0_6, %c0_7] : memref<256x128xbf16, #tpu.memory_space<vmem>>, vector<256x128xbf16>
    %cst_8 = arith.constant dense<0.000000e+00> : vector<16x128xf32>
    %10 = tpu.matmul %8, %9, %cst_8 {dimension_numbers = #tpu.dot_dimension_numbers<[1], [0], [0], [1], [0, 0, 1, 1], [], []>} : vector<16x256xbf16>, vector<256x128xbf16>, vector<16x128xf32> -> vector<16x128xf32>
    %c0_9 = arith.constant 0 : index
    %c0_10 = arith.constant 0 : index
    %11 = vector.load %arg5[%c0_9, %c0_10] : memref<1x128xf32, #tpu.memory_space<vmem>>, vector<1x128xf32>
    %12 = vector.broadcast %11 : vector<1x128xf32> to vector<16x128xf32>
    %13 = arith.addf %10, %12 : vector<16x128xf32>
    %cst_11 = arith.constant dense<0xFF800000> : vector<16xf32>
    %14 = vector.multi_reduction <maximumf>, %13, %cst_11 [1] : vector<16x128xf32> to vector<16xf32>
    %15 = vector.shape_cast %14 : vector<16xf32> to vector<16x1xf32>
    %16 = vector.broadcast %15 : vector<16x1xf32> to vector<16x128xf32>
    %17 = arith.subf %13, %16 : vector<16x128xf32>
    %18 = math.exp %17 : vector<16x128xf32>
    %cst_12 = arith.constant dense<0.000000e+00> : vector<16xf32>
    %19 = vector.multi_reduction <add>, %18, %cst_12 [1] : vector<16x128xf32> to vector<16xf32>
    %20 = vector.shape_cast %19 : vector<16xf32> to vector<16x1xf32>
    %21 = vector.broadcast %20 : vector<16x1xf32> to vector<16x128xf32>
    %22 = arith.divf %18, %21 : vector<16x128xf32>
    %c0_13 = arith.constant 0 : index
    %c0_14 = arith.constant 0 : index
    %23 = vector.load %arg6[%c0_13, %c0_14] : memref<16x128xf32, #tpu.memory_space<vmem>>, vector<16x128xf32>
    tpu.vector_store %arg6[%c0_13, %c0_14], %22 {strides = array<i32>} : memref<16x128xf32, #tpu.memory_space<vmem>>, vector<16x128xf32>,
    return
  }
  func.func @transform_0(%arg0: i32) -> (i32, i32) {
    %c0_i32 = arith.constant 0 : i32
    %c0_i32_0 = arith.constant 0 : i32
    return %arg0, %c0_i32 : i32, i32
  }
  func.func @transform_1(%arg0: i32) -> (i32, i32) {
    %c0_i32 = arith.constant 0 : i32
    %c0_i32_0 = arith.constant 0 : i32
    %c0_i32_1 = arith.constant 0 : i32
    return %c0_i32, %c0_i32_0 : i32, i32
  }
  func.func @transform_2(%arg0: i32) -> (i32, i32) {
    %c0_i32 = arith.constant 0 : i32
    %c0_i32_0 = arith.constant 0 : i32
    %c0_i32_1 = arith.constant 0 : i32
    return %c0_i32, %c0_i32_0 : i32, i32
  }
  func.func @transform_3(%arg0: i32) -> (i32, i32) {
    %c0_i32 = arith.constant 0 : i32
    %c0_i32_0 = arith.constant 0 : i32
    %c0_i32_1 = arith.constant 0 : i32
    return %c0_i32, %c0_i32_0 : i32, i32
  }
  func.func @transform_4(%arg0: i32) -> (i32, i32) {
    %c0_i32 = arith.constant 0 : i32
    %c0_i32_0 = arith.constant 0 : i32
    %c0_i32_1 = arith.constant 0 : i32
    return %c0_i32, %c0_i32_0 : i32, i32
  }
  func.func @transform_5(%arg0: i32) -> (i32, i32) {
    %c0_i32 = arith.constant 0 : i32
    %c0_i32_0 = arith.constant 0 : i32
    return %arg0, %c0_i32 : i32, i32
  }
}

</mosaic_0001>

<llo_original>
// kernel: policy_net_single_layer.1
$region0: #{policy_net_single_layer.1}
  #allocation0 [shape = 'u32[]', space=smem, size = 0x4, offset = 0x4, fixed_abs, tag = 'smem constant byte address 0x4 - core index']
  #allocation1 [shape = 'u32[72,128]{1,0:T(1,128)}', space=vmem, size = 0x9000, scoped, tag = 'internal scratch']
  %s0 = inlined_call_operand.vmem [shape: bf16[16,32], index: 0, kind: input, shape index: {}]
  %s1 = inlined_call_operand.vmem [shape: bf16[32,256], index: 1, kind: input, shape index: {}]
  %s2 = inlined_call_operand.vmem [shape: f32[1,256], index: 2, kind: input, shape index: {}]
  %s3 = inlined_call_operand.vmem [shape: bf16[256,128], index: 3, kind: input, shape index: {}]
  %s4 = inlined_call_operand.vmem [shape: f32[1,128], index: 4, kind: input, shape index: {}]
  %s5 = inlined_call_operand.vmem [shape: f32[16,128], index: 5, kind: output, shape index: {}]
  %s6 = sld [smem:[#allocation0]]
  $region30: #{policy_net_single_layer.1} parent=0
    _
  %s8 = ssub.s32 1, %s6
  %s9 = scalar_select 0, %s8, %s6
  // Predicated region
  $region2: #{policy_net_single_layer.1} parent=0 // pred_check
    _
  $region3: #{policy_net_single_layer.1} parent=0 // pred_check_branch
    %11 = sbr.rel (0) target = $region5
  $region4: #{policy_net_single_layer.1} parent=0 // pred_region
    _
  $region5: #{policy_net_single_layer.1} parent=0 // pred_fallthru
    _
  // Predicated region
  $region6: #{policy_net_single_layer.1} parent=0 // pred_check
    _
  $region7: #{policy_net_single_layer.1} parent=0 // pred_check_branch
    %13 = sbr.rel (0) target = $region9
  $region8: #{policy_net_single_layer.1} parent=0 // pred_region
    _
  $region9: #{policy_net_single_layer.1} parent=0 // pred_fallthru
    _
  // Predicated region
  $region10: #{policy_net_single_layer.1} parent=0 // pred_check
    _
  $region11: #{policy_net_single_layer.1} parent=0 // pred_check_branch
    %15 = sbr.rel (0) target = $region13
  $region12: #{policy_net_single_layer.1} parent=0 // pred_region
    _
  $region13: #{policy_net_single_layer.1} parent=0 // pred_fallthru
    _
  // Predicated region
  $region14: #{policy_net_single_layer.1} parent=0 // pred_check
    _
  $region15: #{policy_net_single_layer.1} parent=0 // pred_check_branch
    %17 = sbr.rel (0) target = $region17
  $region16: #{policy_net_single_layer.1} parent=0 // pred_region
    _
  $region17: #{policy_net_single_layer.1} parent=0 // pred_fallthru
    _
  // Predicated region
  $region18: #{policy_net_single_layer.1} parent=0 // pred_check
    _
  $region19: #{policy_net_single_layer.1} parent=0 // pred_check_branch
    %19 = sbr.rel (0) target = $region21
  $region20: #{policy_net_single_layer.1} parent=0 // pred_region
    _
  $region21: #{policy_net_single_layer.1} parent=0 // pred_fallthru
    _
  %v21 = vld [vmem:[%s0] sm:$0xf]
  %v22 = vld [vmem:[%s0 + $0x4] sm:$0xf]
  %v23 = vld [vmem:[%s1] sm:$0xff]
  %v24 = vld [vmem:[%s1 + $0x8] sm:$0xff]
  %v25 = vld [vmem:[%s1 + $0x10] sm:$0xff]
  %v26 = vld [vmem:[%s1 + $0x18] sm:$0xff]
  %v27 = vld [vmem:[%s2] sm:$0x3]
  %v29 = vperm.slane %v27, 0
  %v30 = vperm.slane %v27, 1
  %v35 = vunpack.c.l.b16 %v21
  %v36 = vunpack.c.l.b16 %v22
  %v37 = vpack.c.b16 %v36, %v35
  %v42 = vunpack.c.l.b16 %v23
  %v43 = vunpack.c.h.b16 %v23
  %v44 = vunpack.c.l.b16 %v24
  %v45 = vunpack.c.h.b16 %v24
  %v46 = vunpack.c.l.b16 %v25
  %v47 = vunpack.c.h.b16 %v25
  %v48 = vunpack.c.l.b16 %v26
  %v49 = vunpack.c.h.b16 %v26
  %v50 = vpack.c.b16 %v44, %v42
  %v51 = vpack.c.b16 %v45, %v43
  %v52 = vpack.c.b16 %v48, %v46
  %v53 = vpack.c.b16 %v49, %v47
  %vm58 = vcmask 261120
  %v60 = vsel %vm58, %v37, 0
  %62 = vmatpush.bf16.msra.mxu0 0
  %63 = vmatpush.bf16.msra.mxu0 0
  %64 = vmatpush.bf16.msra.mxu0 0
  %65 = vmatpush.bf16.msra.mxu0 0
  %66 = vmatpush.bf16.msra.mxu0 0
  %67 = vmatpush.bf16.msra.mxu0 0
  %68 = vmatpush.bf16.msra.mxu0 %v52
  %69 = vmatpush.bf16.msra.mxu0 %v50
  %70 = vmatmul.bf16.gmra.mxu0 %v60
  %v71 = vpop.f32.mrf.mxu0
  %v72 = vadd.f32 %v29, %v71
  %v73 = vpop.f32.mrf.mxu0
  %v74 = vadd.f32 %v29, %v73
  %75 = vdwg.mxu0
  %76 = vmatpush.bf16.msra.mxu0 0
  %77 = vmatpush.bf16.msra.mxu0 0
  %78 = vmatpush.bf16.msra.mxu0 0
  %79 = vmatpush.bf16.msra.mxu0 0
  %80 = vmatpush.bf16.msra.mxu0 0
  %81 = vmatpush.bf16.msra.mxu0 0
  %82 = vmatpush.bf16.msra.mxu0 %v53
  %83 = vmatpush.bf16.msra.mxu0 %v51
  %84 = vmatmul.bf16.gmra.mxu0 %v60
  %v85 = vpop.f32.mrf.mxu0
  %v86 = vadd.f32 %v30, %v85
  %v87 = vpop.f32.mrf.mxu0
  %v88 = vadd.f32 %v30, %v87
  %89 = vdwg.mxu0
  %v90 = vmax.f32 %v72, 0.0
  %v91 = vmax.f32 %v86, 0.0
  %v92 = vmax.f32 %v74, 0.0
  %v93 = vmax.f32 %v88, 0.0
  %v94 = vpack.c.bf16 %v92, %v90
  %v95 = vpack.c.bf16 %v93, %v91
  %v96 = vld [vmem:[%s3] sm:$0xf]
  %v97 = vld [vmem:[%s3 + $0x4] sm:$0xf]
  %v98 = vld [vmem:[%s3 + $0x8] sm:$0xf]
  %v99 = vld [vmem:[%s3 + $0xc] sm:$0xf]
  %v100 = vld [vmem:[%s3 + $0x10] sm:$0xf]
  %v101 = vld [vmem:[%s3 + $0x14] sm:$0xf]
  %v102 = vld [vmem:[%s3 + $0x18] sm:$0xf]
  %v103 = vld [vmem:[%s3 + $0x1c] sm:$0xf]
  %v104 = vld [vmem:[%s3 + $0x20] sm:$0xf]
  %v105 = vld [vmem:[%s3 + $0x24] sm:$0xf]
  %v106 = vld [vmem:[%s3 + $0x28] sm:$0xf]
  %v107 = vld [vmem:[%s3 + $0x2c] sm:$0xf]
  %v108 = vld [vmem:[%s3 + $0x30] sm:$0xf]
  %v109 = vld [vmem:[%s3 + $0x34] sm:$0xf]
  %v110 = vld [vmem:[%s3 + $0x38] sm:$0xf]
  %v111 = vld [vmem:[%s3 + $0x3c] sm:$0xf]
  %v112 = vld [vmem:[%s3 + $0x40] sm:$0xf]
  %v113 = vld [vmem:[%s3 + $0x44] sm:$0xf]
  %v114 = vld [vmem:[%s3 + $0x48] sm:$0xf]
  %v115 = vld [vmem:[%s3 + $0x4c] sm:$0xf]
  %v116 = vld [vmem:[%s3 + $0x50] sm:$0xf]
  %v117 = vld [vmem:[%s3 + $0x54] sm:$0xf]
  %v118 = vld [vmem:[%s3 + $0x58] sm:$0xf]
  %v119 = vld [vmem:[%s3 + $0x5c] sm:$0xf]
  %v120 = vld [vmem:[%s3 + $0x60] sm:$0xf]
  %v121 = vld [vmem:[%s3 + $0x64] sm:$0xf]
  %v122 = vld [vmem:[%s3 + $0x68] sm:$0xf]
  %v123 = vld [vmem:[%s3 + $0x6c] sm:$0xf]
  %v124 = vld [vmem:[%s3 + $0x70] sm:$0xf]
  %v125 = vld [vmem:[%s3 + $0x74] sm:$0xf]
  %v126 = vld [vmem:[%s3 + $0x78] sm:$0xf]
  %v127 = vld [vmem:[%s3 + $0x7c] sm:$0xf]
  %v128 = vld [vmem:[%s4] sm:$0x1]
  %v130 = vperm.slane %v128, 0
  %v164 = vunpack.c.l.b16 %v96
  %v165 = vunpack.c.l.b16 %v97
  %v166 = vunpack.c.l.b16 %v98
  %v167 = vunpack.c.l.b16 %v99
  %v168 = vunpack.c.l.b16 %v100
  %v169 = vunpack.c.l.b16 %v101
  %v170 = vunpack.c.l.b16 %v102
  %v171 = vunpack.c.l.b16 %v103
  %v172 = vunpack.c.l.b16 %v104
  %v173 = vunpack.c.l.b16 %v105
  %v174 = vunpack.c.l.b16 %v106
  %v175 = vunpack.c.l.b16 %v107
  %v176 = vunpack.c.l.b16 %v108
  %v177 = vunpack.c.l.b16 %v109
  %v178 = vunpack.c.l.b16 %v110
  %v179 = vunpack.c.l.b16 %v111
  %v180 = vunpack.c.l.b16 %v112
  %v181 = vunpack.c.l.b16 %v113
  %v182 = vunpack.c.l.b16 %v114
  %v183 = vunpack.c.l.b16 %v115
  %v184 = vunpack.c.l.b16 %v116
  %v185 = vunpack.c.l.b16 %v117
  %v186 = vunpack.c.l.b16 %v118
  %v187 = vunpack.c.l.b16 %v119
  %v188 = vunpack.c.l.b16 %v120
  %v189 = vunpack.c.l.b16 %v121
  %v190 = vunpack.c.l.b16 %v122
  %v191 = vunpack.c.l.b16 %v123
  %v192 = vunpack.c.l.b16 %v124
  %v193 = vunpack.c.l.b16 %v125
  %v194 = vunpack.c.l.b16 %v126
  %v195 = vunpack.c.l.b16 %v127
  %v196 = vpack.c.b16 %v165, %v164
  %v197 = vpack.c.b16 %v167, %v166
  %v198 = vpack.c.b16 %v169, %v168
  %v199 = vpack.c.b16 %v171, %v170
  %v200 = vpack.c.b16 %v173, %v172
  %v201 = vpack.c.b16 %v175, %v174
  %v202 = vpack.c.b16 %v177, %v176
  %v203 = vpack.c.b16 %v179, %v178
  %v204 = vpack.c.b16 %v181, %v180
  %v205 = vpack.c.b16 %v183, %v182
  %v206 = vpack.c.b16 %v185, %v184
  %v207 = vpack.c.b16 %v187, %v186
  %v208 = vpack.c.b16 %v189, %v188
  %v209 = vpack.c.b16 %v191, %v190
  %v210 = vpack.c.b16 %v193, %v192
  %v211 = vpack.c.b16 %v195, %v194
  %228 = vmatpush.bf16.msra.mxu0 %v203
  %229 = vmatpush.bf16.msra.mxu0 %v202
  %230 = vmatpush.bf16.msra.mxu0 %v201
  %231 = vmatpush.bf16.msra.mxu0 %v200
  %232 = vmatpush.bf16.msra.mxu0 %v199
  %233 = vmatpush.bf16.msra.mxu0 %v198
  %234 = vmatpush.bf16.msra.mxu0 %v197
  %235 = vmatpush.bf16.msra.mxu0 %v196
  %236 = vmatmul.bf16.gmra.mxu0 %v94
  %v237 = vpop.f32.mrf.mxu0
  %v238 = vadd.f32 %v130, %v237
  %v239 = vpop.f32.mrf.mxu0
  %v240 = vadd.f32 %v130, %v239
  %241 = vdwg.mxu0
  %242 = vmatpush.bf16.msra.mxu0 %v211
  %243 = vmatpush.bf16.msra.mxu0 %v210
  %244 = vmatpush.bf16.msra.mxu0 %v209
  %245 = vmatpush.bf16.msra.mxu0 %v208
  %246 = vmatpush.bf16.msra.mxu0 %v207
  %247 = vmatpush.bf16.msra.mxu0 %v206
  %248 = vmatpush.bf16.msra.mxu0 %v205
  %249 = vmatpush.bf16.msra.mxu0 %v204
  %250 = vmatmul.bf16.gmra.mxu0 %v95
  %v251 = vpop.f32.mrf.mxu0
  %v252 = vadd.f32 %v238, %v251
  %v253 = vpop.f32.mrf.mxu0
  %v254 = vadd.f32 %v240, %v253
  %255 = vdwg.mxu0
  %256 = vmax.xlane.f32.xlu0 %v252
  %v257 = vpop.xlane.xlu0 %256
  %258 = vmax.xlane.f32.xlu0 %v254
  %v259 = vpop.xlane.xlu0 %258
  %v260 = vsub.f32 %v252, %v257
  %v261 = vsub.f32 %v254, %v259
  %v262 = vmul.f32 %v260, 1.442695
  %v263 = vpow.pop %v262
  %v264 = vmul.f32 %v261, 1.442695
  %v265 = vpow.pop %v264
  %266 = vadd.xlane.f32.xlu0 %v263
  %v267 = vpop.xlane.xlu0 %266
  %268 = vadd.xlane.f32.xlu0 %v265
  %v269 = vpop.xlane.xlu0 %268
  %v270 = vrcp.pop %v267
  %v271 = vmul.f32 %v267, %v270
  %v272 = vsub.f32 1.0, %v271
  %v273 = vmul.f32 %v270, %v272
  %v274 = vadd.f32 %v270, %v273
  %vm275 = vweird.f32 %v267
  %vm276 = vweird.f32 %v270
  %vm277 = vmor %vm275, %vm276
  %v278 = vsel %vm277, %v270, %v274
  %v279 = vand.u32 2147483647, %v267
  %vm280 = vcmp.eq.f32.partialorder %v279, 8.507059e+37
  %v281 = vand.u32 %v267, 2147483648
  %v282 = vor.u32 1.1754944e-38, %v281
  %v283 = vsel %vm280, %v282, %v278
  %v284 = vmul.f32 %v263, %v283
  %v285 = vrcp.pop %v269
  %v286 = vmul.f32 %v269, %v285
  %v287 = vsub.f32 1.0, %v286
  %v288 = vmul.f32 %v285, %v287
  %v289 = vadd.f32 %v285, %v288
  %vm290 = vweird.f32 %v269
  %vm291 = vweird.f32 %v285
  %vm292 = vmor %vm290, %vm291
  %v293 = vsel %vm292, %v285, %v289
  %v294 = vand.u32 2147483647, %v269
  %vm295 = vcmp.eq.f32.partialorder %v294, 8.507059e+37
  %v296 = vand.u32 %v269, 2147483648
  %v297 = vor.u32 1.1754944e-38, %v296
  %v298 = vsel %vm295, %v297, %v293
  %v299 = vmul.f32 %v265, %v298
  %300 = vst [vmem:[%s5] sm:$0xff] %v284
  %301 = vst [vmem:[%s5 + $0x8] sm:$0xff] %v299
  // Predicated region
  $region22: #{policy_net_single_layer.1} parent=0 // pred_check
    _
  $region23: #{policy_net_single_layer.1} parent=0 // pred_check_branch
    %303 = sbr.rel (0) target = $region25
  $region24: #{policy_net_single_layer.1} parent=0 // pred_region
    _
  $region25: #{policy_net_single_layer.1} parent=0 // pred_fallthru
    _
  // Predicated region
  $region26: #{policy_net_single_layer.1} parent=0 // pred_check
    _
  $region27: #{policy_net_single_layer.1} parent=0 // pred_check_branch
    %305 = sbr.rel (0) target = $region29
  $region28: #{policy_net_single_layer.1} parent=0 // pred_region
    _
  $region29: #{policy_net_single_layer.1} parent=0 // pred_fallthru
    _

</llo_original>
